<compile_context>
chip_gen: v6e
topology: v6e:2x2x1
jax: 0.10.0
libtpu: 0.0.40
codegen_flags: <defaults>
</compile_context>

<pallas_src>
import jax
import jax.numpy as jnp
from jax.experimental import pallas as pl
from jax.experimental.pallas import tpu as pltpu

NUM_CLASSES = 19
IGNORE = 255
MAX_TILE_PIX = 8192  # pixels per grid step (multiple of 128)


# ---------------------------------------------------------------------------
# Fused kernel: per-image, per-class pixel counts and per-class sum of -log p.
# ---------------------------------------------------------------------------
def _wce_fused_kernel(logits_ref, t_ref, out_ref, cnt_acc, nlp_acc):
    p = pl.program_id(1)

    @pl.when(p == 0)
    def _():
        cnt_acc[...] = jnp.zeros_like(cnt_acc)
        nlp_acc[...] = jnp.zeros_like(nlp_acc)

    logits = logits_ref[0].astype(jnp.float32)  # (C, TILE_PIX)
    t = t_ref[0]                                # (1, TILE_PIX) int32

    # one-hot over the class (sublane) axis; ignore=255 matches no class,
    # so ignored / padded pixels contribute zero everywhere.
    classes = jax.lax.broadcasted_iota(jnp.int32, (NUM_CLASSES, 1), 0)
    onehot = (t == classes).astype(jnp.float32)  # (C, TILE_PIX)

    # log-softmax over the class (sublane) axis
    m = jnp.max(logits, axis=0, keepdims=True)                       # (1, T)
    lse = m + jnp.log(jnp.sum(jnp.exp(logits - m), axis=0, keepdims=True))
    neg_logp = lse - logits                                          # (C, T)

    cnt_acc[...] += onehot
    nlp_acc[...] += onehot * neg_logp

    @pl.when(p == pl.num_programs(1) - 1)
    def _():
        out_ref[0, :, 0:1] = jnp.sum(cnt_acc[...], axis=1, keepdims=True)
        out_ref[0, :, 1:2] = jnp.sum(nlp_acc[...], axis=1, keepdims=True)


def _wce_stats(logits_ncp, target_n1p, tile):
    """Returns per-image stats of shape (N, NUM_CLASSES, 2):
    [..., 0] = per-class pixel count, [..., 1] = per-class sum of -log p."""
    N, C, HWp = logits_ncp.shape
    grid = (N, HWp // tile)
    return pl.pallas_call(
        _wce_fused_kernel,
        out_shape=jax.ShapeDtypeStruct((N, NUM_CLASSES, 2), jnp.float32),
        grid_spec=pltpu.PrefetchScalarGridSpec(
            num_scalar_prefetch=0,
            grid=grid,
            in_specs=[
                pl.BlockSpec((1, NUM_CLASSES, tile), lambda n, p: (n, 0, p)),
                pl.BlockSpec((1, 1, tile), lambda n, p: (n, 0, p)),
            ],
            out_specs=pl.BlockSpec((1, NUM_CLASSES, 2), lambda n, p: (n, 0, 0)),
            scratch_shapes=[
                pltpu.VMEM((NUM_CLASSES, tile), jnp.float32),
                pltpu.VMEM((NUM_CLASSES, tile), jnp.float32),
            ],
        ),
        compiler_params=pltpu.CompilerParams(
            dimension_semantics=("parallel", "arbitrary")
        ),
    )(logits_ncp, target_n1p)


# ---------------------------------------------------------------------------
# Wrapper matching WeightedCrossEntropyLoss.forward(output, target)
# ---------------------------------------------------------------------------
def _round_up(x, m):
    return (x + m - 1) // m * m


def _pick_tile(hw):
    """Pick a pixel tile (multiple of 128). Prefer one that divides hw exactly
    so the logits never have to be padded/copied; otherwise pad."""
    best = 0
    for t in range(128, MAX_TILE_PIX + 1, 128):
        if hw % t == 0:
            best = t
    if best:
        return best, hw
    tile = min(MAX_TILE_PIX, _round_up(hw, 128))
    return tile, _round_up(hw, tile)


def weighted_cross_entropy_loss(output, target, ignore=IGNORE):
    # The fused kernel relies on the ignore label never matching a class id
    # (true for the module's default ignore=255).
    assert not (0 <= ignore < NUM_CLASSES), "ignore index must lie outside [0, 19)"

    outputs = list(output) if isinstance(output, (list, tuple)) else [output]
    N, H, W = target.shape
    HW = H * W
    total_num = jnp.float32(N * HW)  # torch.prod(target.shape)

    tile, hw_pad = _pick_tile(HW)

    target_r = target.reshape(N, 1, HW).astype(jnp.int32)
    if hw_pad != HW:
        target_r = jnp.pad(
            target_r, ((0, 0), (0, 0), (0, hw_pad - HW)), constant_values=ignore
        )

    loss = jnp.float32(0.0)
    for out in outputs:
        logits_r = out.reshape(N, NUM_CLASSES, HW)  # NCHW consumed directly, no transpose
        if hw_pad != HW:
            logits_r = jnp.pad(logits_r, ((0, 0), (0, 0), (0, hw_pad - HW)))

        stats = _wce_stats(logits_r, target_r, tile)  # (N, C, 2)
        stats = jnp.sum(stats, axis=0)                # (C, 2)
        counts = stats[:, 0]                          # per-class pixel counts
        nll = stats[:, 1]                             # per-class sum of -log p

        w = 1.0 - counts / total_num                  # scaled_weight
        num = jnp.sum(w * nll)                        # sum_valid w[t] * nll
        den = jnp.sum(w * counts)                     # sum_valid w[t]
        loss = loss + num / den                       # F.cross_entropy 'mean'
    return loss


# ---------------------------------------------------------------------------
# Pure-JAX reference for verification
# ---------------------------------------------------------------------------
def _ref_loss(output, target, ignore=IGNORE):
    outputs = list(output) if isinstance(output, (list, tuple)) else [output]
    counts = jnp.stack(
        [jnp.sum((target == i).astype(jnp.float32)) for i in range(NUM_CLASSES)]
    )
    w = 1.0 - counts / jnp.float32(target.size)
    loss = jnp.float32(0.0)
    for out in outputs:
        logp = jax.nn.log_softmax(jnp.transpose(out, (0, 2, 3, 1)), axis=-1)
        valid = target != ignore
        tc = jnp.where(valid, target, 0)
        picked = jnp.take_along_axis(logp, tc[..., None], axis=-1)[..., 0]
        pw = w[tc]
        num = jnp.sum(jnp.where(valid, -picked * pw, 0.0))
        den = jnp.sum(jnp.where(valid, pw, 0.0))
        loss = loss + num / den
    return loss


if __name__ == "__main__":
    key = jax.random.PRNGKey(0)
    k1, k2, k3, k4 = jax.random.split(key, 4)

    N, C, H, W = 2, NUM_CLASSES, 16, 16
    logits = jax.random.normal(k1, (N, C, H, W), dtype=jnp.float32)
    logits2 = jax.random.normal(k4, (N, C, H, W), dtype=jnp.float32)
    target = jax.random.randint(k2, (N, H, W), 0, NUM_CLASSES, dtype=jnp.int32)
    ignore_mask = jax.random.uniform(k3, (N, H, W)) < 0.1
    target = jnp.where(ignore_mask, IGNORE, target)

    # single-output path
    loss = jax.block_until_ready(weighted_cross_entropy_loss(logits, target))
    ref = jax.block_until_ready(_ref_loss(logits, target))
    assert jnp.allclose(loss, ref, rtol=1e-4, atol=1e-5), (loss, ref)

    # list-of-outputs path (the module's list branch)
    loss_l = jax.block_until_ready(
        weighted_cross_entropy_loss([logits, logits2], target)
    )
    ref_l = jax.block_until_ready(_ref_loss([logits, logits2], target))
    assert jnp.allclose(loss_l, ref_l, rtol=1e-4, atol=1e-5), (loss_l, ref_l)

    # spatial size not a multiple of 128 -> exercises the padded-remainder path
    H2, W2 = 15, 17
    logits3 = jax.random.normal(k1, (N, C, H2, W2), dtype=jnp.float32)
    target3 = jax.random.randint(k2, (N, H2, W2), 0, NUM_CLASSES, dtype=jnp.int32)
    loss3 = jax.block_until_ready(weighted_cross_entropy_loss(logits3, target3))
    ref3 = jax.block_until_ready(_ref_loss(logits3, target3))
    assert jnp.allclose(loss3, ref3, rtol=1e-4, atol=1e-5), (loss3, ref3)

    print("KERNEL_OK")
</pallas_src>

<mosaic_0001>
module attributes {stable_mosaic.version = 11 : i64} {
  func.func @_wce_fused_kernel(%arg0: i32, %arg1: i32, %arg2: memref<1x19x256xf32, #tpu.memory_space<vmem>>, %arg3: memref<1x1x256xi32, #tpu.memory_space<vmem>>, %arg4: memref<1x19x2xf32, #tpu.memory_space<vmem>>, %arg5: memref<19x256xf32, #tpu.memory_space<vmem>>, %arg6: memref<19x256xf32, #tpu.memory_space<vmem>>) attributes {dimension_semantics = [#tpu.dimension_semantics<parallel>, #tpu.dimension_semantics<arbitrary>], iteration_bounds = array<i64: 2, 1>, scalar_prefetch = 0 : i64, scratch_operands = 2 : i64, tpu.core_type = #tpu.core_type<tc>, window_params = [{transform_indices = @transform_0, window_bounds = array<i64: 1, 19, 256>}, {transform_indices = @transform_1, window_bounds = array<i64: 1, 1, 256>}, {transform_indices = @transform_2, window_bounds = array<i64: 1, 19, 2>}]} {
    %c0_i32 = arith.constant 0 : i32
    %0 = arith.cmpi eq, %arg1, %c0_i32 : i32
    %1 = arith.extui %0 : i1 to i32
    %c0_i32_0 = arith.constant 0 : i32
    %2 = arith.cmpi ne, %1, %c0_i32_0 : i32
    scf.if %2 {
      %cst_17 = arith.constant 0.000000e+00 : f32
      %34 = vector.broadcast %cst_17 : f32 to vector<19x256xf32>
      %c0_18 = arith.constant 0 : index
      %c0_19 = arith.constant 0 : index
      %35 = vector.load %arg5[%c0_18, %c0_19] : memref<19x256xf32, #tpu.memory_space<vmem>>, vector<19x256xf32>
      tpu.vector_store %arg5[%c0_18, %c0_19], %34 {strides = array<i32>} : memref<19x256xf32, #tpu.memory_space<vmem>>, vector<19x256xf32>,
      %cst_20 = arith.constant 0.000000e+00 : f32
      %36 = vector.broadcast %cst_20 : f32 to vector<19x256xf32>
      %c0_21 = arith.constant 0 : index
      %c0_22 = arith.constant 0 : index
      %37 = vector.load %arg6[%c0_21, %c0_22] : memref<19x256xf32, #tpu.memory_space<vmem>>, vector<19x256xf32>
      tpu.vector_store %arg6[%c0_21, %c0_22], %36 {strides = array<i32>} : memref<19x256xf32, #tpu.memory_space<vmem>>, vector<19x256xf32>,
    } else {
    }
    %c0 = arith.constant 0 : index
    %c0_1 = arith.constant 0 : index
    %c0_2 = arith.constant 0 : index
    %3 = vector.load %arg2[%c0, %c0_1, %c0_2] : memref<1x19x256xf32, #tpu.memory_space<vmem>>, vector<1x19x256xf32>
    %4 = vector.shape_cast %3 : vector<1x19x256xf32> to vector<19x256xf32>
    %c0_3 = arith.constant 0 : index
    %c0_4 = arith.constant 0 : index
    %c0_5 = arith.constant 0 : index
    %5 = vector.load %arg3[%c0_3, %c0_4, %c0_5] : memref<1x1x256xi32, #tpu.memory_space<vmem>>, vector<1x1x256xi32>
    %6 = vector.shape_cast %5 : vector<1x1x256xi32> to vector<1x256xi32>
    %7 = tpu.iota {dimensions = array<i32: 0>} : vector<19x1xi32>
    %8 = vector.broadcast %6 : vector<1x256xi32> to vector<19x256xi32>
    %9 = vector.broadcast %7 : vector<19x1xi32> to vector<19x256xi32>
    %10 = arith.cmpi eq, %8, %9 : vector<19x256xi32>
    %11 = arith.extui %10 : vector<19x256xi1> to vector<19x256xi32>
    %12 = arith.sitofp %11 : vector<19x256xi32> to vector<19x256xf32>
    %cst = arith.constant dense<0xFF800000> : vector<256xf32>
    %13 = vector.multi_reduction <maximumf>, %4, %cst [0] : vector<19x256xf32> to vector<256xf32>
    %14 = vector.shape_cast %13 : vector<256xf32> to vector<1x256xf32>
    %15 = vector.broadcast %14 : vector<1x256xf32> to vector<19x256xf32>
    %16 = arith.subf %4, %15 : vector<19x256xf32>
    %17 = math.exp %16 : vector<19x256xf32>
    %cst_6 = arith.constant dense<0.000000e+00> : vector<256xf32>
    %18 = vector.multi_reduction <add>, %17, %cst_6 [0] : vector<19x256xf32> to vector<256xf32>
    %19 = vector.shape_cast %18 : vector<256xf32> to vector<1x256xf32>
    %20 = math.log %19 : vector<1x256xf32>
    %21 = arith.addf %14, %20 : vector<1x256xf32>
    %22 = vector.broadcast %21 : vector<1x256xf32> to vector<19x256xf32>
    %23 = arith.subf %22, %4 : vector<19x256xf32>
    %c0_7 = arith.constant 0 : index
    %c0_8 = arith.constant 0 : index
    %24 = vector.load %arg5[%c0_7, %c0_8] : memref<19x256xf32, #tpu.memory_space<vmem>>, vector<19x256xf32>
    %25 = arith.addf %24, %12 : vector<19x256xf32>
    %c0_9 = arith.constant 0 : index
    %c0_10 = arith.constant 0 : index
    %26 = vector.load %arg5[%c0_9, %c0_10] : memref<19x256xf32, #tpu.memory_space<vmem>>, vector<19x256xf32>
    tpu.vector_store %arg5[%c0_9, %c0_10], %25 {strides = array<i32>} : memref<19x256xf32, #tpu.memory_space<vmem>>, vector<19x256xf32>,
    %c0_11 = arith.constant 0 : index
    %c0_12 = arith.constant 0 : index
    %27 = vector.load %arg6[%c0_11, %c0_12] : memref<19x256xf32, #tpu.memory_space<vmem>>, vector<19x256xf32>
    %28 = arith.mulf %12, %23 : vector<19x256xf32>
    %29 = arith.addf %27, %28 : vector<19x256xf32>
    %c0_13 = arith.constant 0 : index
    %c0_14 = arith.constant 0 : index
    %30 = vector.load %arg6[%c0_13, %c0_14] : memref<19x256xf32, #tpu.memory_space<vmem>>, vector<19x256xf32>
    tpu.vector_store %arg6[%c0_13, %c0_14], %29 {strides = array<i32>} : memref<19x256xf32, #tpu.memory_space<vmem>>, vector<19x256xf32>,
    %c0_i32_15 = arith.constant 0 : i32
    %31 = arith.cmpi eq, %arg1, %c0_i32_15 : i32
    %32 = arith.extui %31 : i1 to i32
    %c0_i32_16 = arith.constant 0 : i32
    %33 = arith.cmpi ne, %32, %c0_i32_16 : i32
    scf.if %33 {
      %c0_17 = arith.constant 0 : index
      %c0_18 = arith.constant 0 : index
      %34 = vector.load %arg5[%c0_17, %c0_18] : memref<19x256xf32, #tpu.memory_space<vmem>>, vector<19x256xf32>
      %cst_19 = arith.constant dense<0.000000e+00> : vector<19xf32>
      %35 = vector.multi_reduction <add>, %34, %cst_19 [1] : vector<19x256xf32> to vector<19xf32>
      %36 = vector.shape_cast %35 : vector<19xf32> to vector<19x1xf32>
      %c0_20 = arith.constant 0 : index
      %c0_21 = arith.constant 0 : index
      %c0_22 = arith.constant 0 : index
      %37 = vector.load %arg4[%c0_20, %c0_21, %c0_22] : memref<1x19x2xf32, #tpu.memory_space<vmem>>, vector<1x19x1xf32>
      %38 = vector.shape_cast %37 : vector<1x19x1xf32> to vector<19x1xf32>
      %39 = vector.shape_cast %36 : vector<19x1xf32> to vector<1x19x1xf32>
      tpu.vector_store %arg4[%c0_20, %c0_21, %c0_22], %39 {strides = array<i32>} : memref<1x19x2xf32, #tpu.memory_space<vmem>>, vector<1x19x1xf32>,
      %c0_23 = arith.constant 0 : index
      %c0_24 = arith.constant 0 : index
      %40 = vector.load %arg6[%c0_23, %c0_24] : memref<19x256xf32, #tpu.memory_space<vmem>>, vector<19x256xf32>
      %cst_25 = arith.constant dense<0.000000e+00> : vector<19xf32>
      %41 = vector.multi_reduction <add>, %40, %cst_25 [1] : vector<19x256xf32> to vector<19xf32>
      %42 = vector.shape_cast %41 : vector<19xf32> to vector<19x1xf32>
      %c0_26 = arith.constant 0 : index
      %c0_27 = arith.constant 0 : index
      %c1 = arith.constant 1 : index
      %43 = vector.load %arg4[%c0_26, %c0_27, %c1] : memref<1x19x2xf32, #tpu.memory_space<vmem>>, vector<1x19x1xf32>
      %44 = vector.shape_cast %43 : vector<1x19x1xf32> to vector<19x1xf32>
      %45 = vector.shape_cast %42 : vector<19x1xf32> to vector<1x19x1xf32>
      tpu.vector_store %arg4[%c0_26, %c0_27, %c1], %45 {strides = array<i32>} : memref<1x19x2xf32, #tpu.memory_space<vmem>>, vector<1x19x1xf32>,
    } else {
    }
    return
  }
  func.func @transform_0(%arg0: i32, %arg1: i32) -> (i32, i32, i32) {
    %c0_i32 = arith.constant 0 : i32
    %c0_i32_0 = arith.constant 0 : i32
    return %arg0, %c0_i32, %arg1 : i32, i32, i32
  }
  func.func @transform_1(%arg0: i32, %arg1: i32) -> (i32, i32, i32) {
    %c0_i32 = arith.constant 0 : i32
    %c0_i32_0 = arith.constant 0 : i32
    return %arg0, %c0_i32, %arg1 : i32, i32, i32
  }
  func.func @transform_2(%arg0: i32, %arg1: i32) -> (i32, i32, i32) {
    %c0_i32 = arith.constant 0 : i32
    %c0_i32_0 = arith.constant 0 : i32
    %c0_i32_1 = arith.constant 0 : i32
    return %arg0, %c0_i32, %c0_i32_0 : i32, i32, i32
  }
}

</mosaic_0001>

<llo_original>
// kernel: tpu_custom_call.1
$region0: #{tpu_custom_call.1}
  #allocation0 [shape = 'u32[]', space=smem, size = 0x4, offset = 0x4, fixed_abs, tag = 'smem constant byte address 0x4 - core index']
  #allocation1 [shape = 'u32[144,128]{1,0:T(1,128)}', space=vmem, size = 0x12000, scoped, tag = 'internal scratch']
  #allocation2 [shape = 'f32[19,256]{1,0:T(8,128)}', space=vmem, size = 0x6000, scoped, tag = 'scratch operand']
  #allocation3 [shape = 'f32[19,256]{1,0:T(8,128)}', space=vmem, size = 0x6000, scoped, tag = 'scratch operand']
  %s0 = inlined_call_operand.vmem [shape: f32[2,19,256], index: 0, kind: input, shape index: {}]
  %s1 = inlined_call_operand.vmem [shape: s32[2,1,256], index: 1, kind: input, shape index: {}]
  %s2 = inlined_call_operand.vmem [shape: f32[2,19,2], index: 2, kind: output, shape index: {}]
  %s3 = sld [smem:[#allocation0]]
  $region49: #{tpu_custom_call.1} parent=0
    _
  %s5 = ssub.s32 1, %s3
  %s6 = scalar_select 0, %s5, %s3
  loop: start=0, step=1, limit=4
  $region2: #{tpu_custom_call.1} parent=0 // loop_pre_header
    _
  $region3: #{tpu_custom_call.1} parent=0 // loop_header
    %s8 = sphi 0, %s12
    %p9 = scmp.ge.s32.totalorder %s8, 4
    %s15 = sphi 0, %s27
    %s16 = sphi 0, %s23
    %s17 = sphi 0, %s15
    %s18 = sphi 0, %s16
    %s19 = sphi 0, %s17
    %s20 = sphi 0, %s18
    %s32 = sphi 0, %s34
    %s35 = sphi 0, %s32
    %s36 = sphi 0, %s35
    %s52 = sphi 0, %s36
    %s60 = sphi 0, %s62
    %s63 = sphi 0, %s60
    %s64 = sphi 0, %s63
    %s80 = sphi 0, %s64
    %s86 = sphi 0, %s88
    %s89 = sphi 0, %s86
    %s90 = sphi 0, %s89
    %s106 = sphi 0, %s90
  $region4: #{tpu_custom_call.1} parent=0 // loop_header_branch
    %11 = sbr.rel (%p9) target = $region8
  $region5: #{tpu_custom_call.1} parent=0 // loop_body
    %s13 = ssub.s32 %s8, 1
    %s14 = ssub.s32 %s8, 2
    %s21 = sadd.s32 1, %s16
    %p22 = scmp.ge.s32.totalorder %s21, 1
    %s23 = scalar_select %p22, 0, %s21
    %s24 = sadd.s32 1, %s15
    %s25 = scalar_select %p22, %s24, %s15
    %p26 = scmp.ge.s32.totalorder %s25, 2
    %s27 = scalar_select %p26, 0, %s25
    %s28 = ssub.s32 %s15, %s27
    %s29 = ssub.s32 %s16, %s23
    %s30 = sor.u32 %s28, %s29
    %p31 = scmp.eq.s32.totalorder %s30, 0
    %s33 = sadd.s32 %s32, 1
    %s34 = scalar_select %p31, %s32, %s33
    %p37 = pneg %p31
    %p38 = scmp.eq.s32.totalorder %s8, 1
    %p39 = por %p37, %p38
    %p40 = scmp.ne.s32.totalorder %s32, %s35
    %p41 = scmp.eq.s32.totalorder %s8, 0
    %p42 = por %p40, %p41
    %p43 = scmp.ne.s32.totalorder %s32, %s35
    %p44 = scmp.eq.s32.totalorder %s13, 1
    %p45 = por %p43, %p44
    %p46 = scmp.ne.s32.totalorder %s35, %s36
    %p47 = scmp.eq.s32.totalorder %s13, 0
    %p48 = por %p46, %p47
    %p49 = scmp.ne.s32.totalorder %s35, %s36
    %p50 = scmp.eq.s32.totalorder %s14, 1
    %p51 = por %p49, %p50
    %p53 = scmp.ne.s32.totalorder %s36, %s52
    %p54 = scmp.eq.s32.totalorder %s14, 0
    %p55 = por %p53, %p54
    %s56 = ssub.s32 %s15, %s27
    %s57 = ssub.s32 %s16, %s23
    %s58 = sor.u32 %s56, %s57
    %p59 = scmp.eq.s32.totalorder %s58, 0
    %s61 = sadd.s32 %s60, 1
    %s62 = scalar_select %p59, %s60, %s61
    %p65 = pneg %p59
    %p66 = scmp.eq.s32.totalorder %s8, 1
    %p67 = por %p65, %p66
    %p68 = scmp.ne.s32.totalorder %s60, %s63
    %p69 = scmp.eq.s32.totalorder %s8, 0
    %p70 = por %p68, %p69
    %p71 = scmp.ne.s32.totalorder %s60, %s63
    %p72 = scmp.eq.s32.totalorder %s13, 1
    %p73 = por %p71, %p72
    %p74 = scmp.ne.s32.totalorder %s63, %s64
    %p75 = scmp.eq.s32.totalorder %s13, 0
    %p76 = por %p74, %p75
    %p77 = scmp.ne.s32.totalorder %s63, %s64
    %p78 = scmp.eq.s32.totalorder %s14, 1
    %p79 = por %p77, %p78
    %p81 = scmp.ne.s32.totalorder %s64, %s80
    %p82 = scmp.eq.s32.totalorder %s14, 0
    %p83 = por %p81, %p82
    %s84 = ssub.s32 %s15, %s27
    %p85 = scmp.eq.s32.totalorder %s84, 0
    %s87 = sadd.s32 %s86, 1
    %s88 = scalar_select %p85, %s86, %s87
    %p91 = pneg %p85
    %p92 = scmp.eq.s32.totalorder %s8, 1
    %p93 = por %p91, %p92
    %p94 = scmp.ne.s32.totalorder %s86, %s89
    %p95 = scmp.eq.s32.totalorder %s8, 0
    %p96 = por %p94, %p95
    %p97 = scmp.ne.s32.totalorder %s86, %s89
    %p98 = scmp.eq.s32.totalorder %s13, 1
    %p99 = por %p97, %p98
    %p100 = scmp.ne.s32.totalorder %s89, %s90
    %p101 = scmp.eq.s32.totalorder %s13, 0
    %p102 = por %p100, %p101
    %p103 = scmp.ne.s32.totalorder %s89, %s90
    %p104 = scmp.eq.s32.totalorder %s14, 1
    %p105 = por %p103, %p104
    %p107 = scmp.ne.s32.totalorder %s90, %s106
    %p108 = scmp.eq.s32.totalorder %s14, 0
    %p109 = por %p107, %p108
    %p110 = scmp.le.s32.totalorder 1, %s8
    %p111 = scmp.lt.s32.totalorder %s8, 3
    %p112 = pnand %p110, %p111
    %p113 = pneg %p112
    // Predicated region
    $region9: #{tpu_custom_call.1} parent=5 // pred_check
      _
    $region10: #{tpu_custom_call.1} parent=5 // pred_check_branch
      %115 = sbr.rel (%p112) target = $region12
    $region11: #{tpu_custom_call.1} parent=5 // pred_region
      %s116 = ssub.s32 %s8, 1
    $region12: #{tpu_custom_call.1} parent=5 // pred_fallthru
      _
    %p117 = scmp.lt.s32.totalorder %s8, 2
    // Predicated region
    $region13: #{tpu_custom_call.1} parent=5 // pred_check
      %p118 = pneg %p117
    $region14: #{tpu_custom_call.1} parent=5 // pred_check_branch
      %120 = sbr.rel (%p118) target = $region16
    $region15: #{tpu_custom_call.1} parent=5 // pred_region
      // Predicated region
      $region17: #{tpu_custom_call.1} parent=15 // pred_check
        %p121 = pneg %p42
      $region18: #{tpu_custom_call.1} parent=15 // pred_check_branch
        %123 = sbr.rel (%p121) target = $region20
      $region19: #{tpu_custom_call.1} parent=15 // pred_region
        %s124 = smul.u32 2, %s16
        %p125 = scmp.lt.s32.totalorder %s15, 1
        %s126 = scalar_select %p125, %s15, 1
        %p127 = scmp.lt.s32.totalorder %s124, 1
        %s128 = scalar_select %p127, %s124, 1
        %s129 = smul.addr %s126, 6
        %s130 = sadd.s32 %s128, %s129
        %s131 = smul.addr %s130, 8
        %s132 = scalar_lea.vmem %s0, %s131
        %s133 = smul.u32 2, %s16
      $region20: #{tpu_custom_call.1} parent=15 // pred_fallthru
        _
      // Predicated region
      $region21: #{tpu_custom_call.1} parent=15 // pred_check
        %p134 = pneg %p70
      $region22: #{tpu_custom_call.1} parent=15 // pred_check_branch
        %136 = sbr.rel (%p134) target = $region24
      $region23: #{tpu_custom_call.1} parent=15 // pred_region
        %s137 = smul.u32 2, %s16
        %p138 = scmp.lt.s32.totalorder %s15, 1
        %s139 = scalar_select %p138, %s15, 1
        %p140 = scmp.lt.s32.totalorder %s137, 1
        %s141 = scalar_select %p140, %s137, 1
        %s142 = smul.addr %s139, 2
        %s143 = sadd.s32 %s141, %s142
        %s144 = scalar_lea.vmem %s1, %s143
        %s145 = smul.u32 2, %s16
      $region24: #{tpu_custom_call.1} parent=15 // pred_fallthru
        _
    $region16: #{tpu_custom_call.1} parent=5 // pred_fallthru
      _
    %p146 = scmp.le.s32.totalorder 1, %s8
    %p147 = scmp.lt.s32.totalorder %s8, 3
    %p148 = pnand %p146, %p147
    %p149 = pneg %p148
    // Predicated region
    $region25: #{tpu_custom_call.1} parent=5 // pred_check
      _
    $region26: #{tpu_custom_call.1} parent=5 // pred_check_branch
      %151 = sbr.rel (%p148) target = $region28
    $region27: #{tpu_custom_call.1} parent=5 // pred_region
      %s152 = ssub.s32 %s8, 1
      %s153 = smul.u32 2, %s18
      %p154 = scmp.lt.s32.totalorder %s17, 1
      %s155 = scalar_select %p154, %s17, 1
      %p156 = scmp.lt.s32.totalorder %s153, 1
      %s157 = scalar_select %p156, %s153, 1
      %s158 = smul.addr %s155, 6
      %s159 = sadd.s32 %s157, %s158
      %s160 = smul.addr %s159, 8
      %s161 = scalar_lea.vmem %s0, %s160
      %p162 = pneg %p48
      %p163 = pneg %p45
      %s164 = smul.u32 2, %s18
      %p165 = scmp.lt.s32.totalorder %s17, 1
      %s166 = scalar_select %p165, %s17, 1
      %p167 = scmp.lt.s32.totalorder %s164, 1
      %s168 = scalar_select %p167, %s164, 1
      %s169 = smul.addr %s166, 2
      %s170 = sadd.s32 %s168, %s169
      %s171 = scalar_lea.vmem %s1, %s170
      %p172 = pneg %p76
      %p173 = pneg %p73
      %p174 = pneg %p102
      %p175 = pneg %p99
      %p176 = scmp.lt.s32.totalorder %s17, 1
      %s177 = scalar_select %p176, %s17, 1
      %s178 = smul.addr %s177, 3
      %s179 = smul.addr %s178, 8
      %s180 = scalar_lea.vmem %s2, %s179
      %s181 = smul.u32 2, %s18
      %p182 = scmp.lt.s32.totalorder %s17, 1
      %s183 = scalar_select %p182, %s17, 1
      %p184 = scmp.lt.s32.totalorder %s181, 1
      %s185 = scalar_select %p184, %s181, 1
      %s186 = smul.addr %s183, 6
      %s187 = sadd.s32 %s185, %s186
      %s188 = smul.addr %s187, 8
      %s189 = scalar_lea.vmem %s0, %s188
      %s190 = smul.u32 2, %s18
      %s191 = smul.u32 2, %s18
      %p192 = scmp.lt.s32.totalorder %s17, 1
      %s193 = scalar_select %p192, %s17, 1
      %p194 = scmp.lt.s32.totalorder %s191, 1
      %s195 = scalar_select %p194, %s191, 1
      %s196 = smul.addr %s193, 2
      %s197 = sadd.s32 %s195, %s196
      %s198 = scalar_lea.vmem %s1, %s197
      %s199 = smul.u32 2, %s18
      %p200 = scmp.lt.s32.totalorder %s17, 1
      %s201 = scalar_select %p200, %s17, 1
      %s202 = smul.addr %s201, 3
      %s203 = smul.addr %s202, 8
      %s204 = scalar_lea.vmem %s2, %s203
      %p205 = scmp.eq.s32.totalorder %s18, 0
      // Predicated region
      $region29: #{tpu_custom_call.1} parent=27 // pred_check
        %p206 = pneg %p205
      $region30: #{tpu_custom_call.1} parent=27 // pred_check_branch
        %208 = sbr.rel (%p206) target = $region32
      $region31: #{tpu_custom_call.1} parent=27 // pred_region
        %209 = vst [vmem:[#allocation2] sm:$0xff] 0.0
        %210 = vst [vmem:[#allocation2 + $0x8] sm:$0xff] 0.0
        %211 = vst [vmem:[#allocation2 + $0x10] sm:$0xff] 0.0
        %212 = vst [vmem:[#allocation2 + $0x18] sm:$0xff] 0.0
        %213 = vst [vmem:[#allocation2 + $0x20] sm:$0x7] 0.0
        %214 = vst [vmem:[#allocation2 + $0x28] sm:$0x7] 0.0
        %215 = vst [vmem:[#allocation3] sm:$0xff] 0.0
        %216 = vst [vmem:[#allocation3 + $0x8] sm:$0xff] 0.0
        %217 = vst [vmem:[#allocation3 + $0x10] sm:$0xff] 0.0
        %218 = vst [vmem:[#allocation3 + $0x18] sm:$0xff] 0.0
        %219 = vst [vmem:[#allocation3 + $0x20] sm:$0x7] 0.0
        %220 = vst [vmem:[#allocation3 + $0x28] sm:$0x7] 0.0
      $region32: #{tpu_custom_call.1} parent=27 // pred_fallthru
        _
      %v221 = vld [vmem:[%s189] sm:$0xff]
      %v222 = vld [vmem:[%s189 + $0x8] sm:$0xff]
      %v223 = vld [vmem:[%s189 + $0x10] sm:$0xff]
      %v224 = vld [vmem:[%s189 + $0x18] sm:$0xff]
      %v225 = vld [vmem:[%s189 + $0x20] sm:$0x7]
      %v226 = vld [vmem:[%s189 + $0x28] sm:$0x7]
      %v227 = vld [vmem:[%s198] sm:$0x3]
      %v228 = vlaneseq
      %v229 = vshrl.u32 %v228, 7
      %v230 = vadd.s32 %v229, 8
      %v231 = vadd.s32 %v229, 16
      %v232 = vlaneseq
      %v233 = vshrl.u32 %v232, 7
      %v234 = vsub.s32 0, %v233
      %v235 = vrot.slane %v227, %v234
      %v236 = vlaneseq
      %v237 = vshrl.u32 %v236, 7
      %v238 = vsub.s32 1, %v237
      %v239 = vrot.slane %v227, %v238
      %vm240 = vcmp.eq.s32.totalorder %v235, %v229
      %vm241 = vcmp.eq.s32.totalorder %v239, %v229
      %vm242 = vcmp.eq.s32.totalorder %v235, %v230
      %vm243 = vcmp.eq.s32.totalorder %v239, %v230
      %vm244 = vcmp.eq.s32.totalorder %v235, %v231
      %vm245 = vcmp.eq.s32.totalorder %v239, %v231
      %v246 = vsel %vm240, 1, 0
      %v247 = vsel %vm241, 1, 0
      %v248 = vsel %vm242, 1, 0
      %v249 = vsel %vm243, 1, 0
      %v250 = vsel %vm244, 1, 0
      %v251 = vsel %vm245, 1, 0
      %v252 = vcvt.s32.f32 %v246
      %v253 = vcvt.s32.f32 %v247
      %v254 = vcvt.s32.f32 %v248
      %v255 = vcvt.s32.f32 %v249
      %v256 = vcvt.s32.f32 %v250
      %v257 = vcvt.s32.f32 %v251
      %vm258 = vcmask 1042432
      %v259 = vsel %vm258, %v225, -inf
      %v260 = vmax.f32 %v221, %v259
      %v261 = vmax.f32 %v260, %v223
      %v262 = vrot.slane %v261, 4
      %v263 = vmax.f32 %v261, %v262
      %v264 = vrot.slane %v263, 2
      %v265 = vmax.f32 %v263, %v264
      %v266 = vrot.slane %v265, 1
      %v267 = vmax.f32 %v265, %v266
      %v268 = vsel %vm258, %v226, -inf
      %v269 = vmax.f32 %v222, %v268
      %v270 = vmax.f32 %v269, %v224
      %v271 = vrot.slane %v270, 4
      %v272 = vmax.f32 %v270, %v271
      %v273 = vrot.slane %v272, 2
      %v274 = vmax.f32 %v272, %v273
      %v275 = vrot.slane %v274, 1
      %v276 = vmax.f32 %v274, %v275
      %v277 = vsub.f32 %v221, %v267
      %v278 = vsub.f32 %v222, %v276
      %v279 = vsub.f32 %v223, %v267
      %v280 = vsub.f32 %v224, %v276
      %v281 = vsub.f32 %v225, %v267
      %v282 = vsub.f32 %v226, %v276
      %v283 = vmul.f32 %v277, 1.442695
      %v284 = vpow.pop %v283
      %v285 = vmul.f32 %v278, 1.442695
      %v286 = vpow.pop %v285
      %v287 = vmul.f32 %v279, 1.442695
      %v288 = vpow.pop %v287
      %v289 = vmul.f32 %v280, 1.442695
      %v290 = vpow.pop %v289
      %v291 = vmul.f32 %v281, 1.442695
      %v292 = vpow.pop %v291
      %v293 = vmul.f32 %v282, 1.442695
      %v294 = vpow.pop %v293
      %v295 = vadd.f32 %v284, %v288
      %v296 = vsel %vm258, %v292, 0.0
      %v297 = vadd.f32 %v295, %v296
      %v298 = vrot.slane %v297, 4
      %v299 = vadd.f32 %v297, %v298
      %v300 = vrot.slane %v299, 2
      %v301 = vadd.f32 %v299, %v300
      %v302 = vrot.slane %v301, 1
      %v303 = vadd.f32 %v301, %v302
      %v304 = vadd.f32 %v286, %v290
      %v305 = vsel %vm258, %v294, 0.0
      %v306 = vadd.f32 %v304, %v305
      %v307 = vrot.slane %v306, 4
      %v308 = vadd.f32 %v306, %v307
      %v309 = vrot.slane %v308, 2
      %v310 = vadd.f32 %v308, %v309
      %v311 = vrot.slane %v310, 1
      %v312 = vadd.f32 %v310, %v311
      %v313 = vlog2.pop %v303
      %v314 = vmul.f32 %v313, 0.6931472
      %v315 = vlog2.pop %v312
      %v316 = vmul.f32 %v315, 0.6931472
      %v317 = vadd.f32 %v267, %v314
      %v318 = vadd.f32 %v276, %v316
      %v319 = vsub.f32 %v317, %v221
      %v320 = vsub.f32 %v318, %v222
      %v321 = vsub.f32 %v317, %v223
      %v322 = vsub.f32 %v318, %v224
      %v323 = vsub.f32 %v317, %v225
      %v324 = vsub.f32 %v318, %v226
      %v325 = vld [vmem:[#allocation2] sm:$0xff]
      %v326 = vld [vmem:[#allocation2 + $0x8] sm:$0xff]
      %v327 = vld [vmem:[#allocation2 + $0x10] sm:$0xff]
      %v328 = vld [vmem:[#allocation2 + $0x18] sm:$0xff]
      %v329 = vld [vmem:[#allocation2 + $0x20] sm:$0x7]
      %v330 = vld [vmem:[#allocation2 + $0x28] sm:$0x7]
      %v331 = vadd.f32 %v325, %v252
      %v332 = vadd.f32 %v326, %v253
      %v333 = vadd.f32 %v327, %v254
      %v334 = vadd.f32 %v328, %v255
      %v335 = vadd.f32 %v329, %v256
      %v336 = vadd.f32 %v330, %v257
      %337 = vst [vmem:[#allocation2] sm:$0xff] %v331
      %338 = vst [vmem:[#allocation2 + $0x8] sm:$0xff] %v332
      %339 = vst [vmem:[#allocation2 + $0x10] sm:$0xff] %v333
      %340 = vst [vmem:[#allocation2 + $0x18] sm:$0xff] %v334
      %341 = vst [vmem:[#allocation2 + $0x20] sm:$0x7] %v335
      %342 = vst [vmem:[#allocation2 + $0x28] sm:$0x7] %v336
      %v343 = vld [vmem:[#allocation3] sm:$0xff]
      %v344 = vld [vmem:[#allocation3 + $0x8] sm:$0xff]
      %v345 = vld [vmem:[#allocation3 + $0x10] sm:$0xff]
      %v346 = vld [vmem:[#allocation3 + $0x18] sm:$0xff]
      %v347 = vld [vmem:[#allocation3 + $0x20] sm:$0x7]
      %v348 = vld [vmem:[#allocation3 + $0x28] sm:$0x7]
      %v349 = vmul.f32 %v252, %v319
      %v350 = vmul.f32 %v253, %v320
      %v351 = vmul.f32 %v254, %v321
      %v352 = vmul.f32 %v255, %v322
      %v353 = vmul.f32 %v256, %v323
      %v354 = vmul.f32 %v257, %v324
      %v355 = vadd.f32 %v343, %v349
      %v356 = vadd.f32 %v344, %v350
      %v357 = vadd.f32 %v345, %v351
      %v358 = vadd.f32 %v346, %v352
      %v359 = vadd.f32 %v347, %v353
      %v360 = vadd.f32 %v348, %v354
      %361 = vst [vmem:[#allocation3] sm:$0xff] %v355
      %362 = vst [vmem:[#allocation3 + $0x8] sm:$0xff] %v356
      %363 = vst [vmem:[#allocation3 + $0x10] sm:$0xff] %v357
      %364 = vst [vmem:[#allocation3 + $0x18] sm:$0xff] %v358
      %365 = vst [vmem:[#allocation3 + $0x20] sm:$0x7] %v359
      %366 = vst [vmem:[#allocation3 + $0x28] sm:$0x7] %v360
      // Predicated region
      $region33: #{tpu_custom_call.1} parent=27 // pred_check
        %p367 = pneg %p205
      $region34: #{tpu_custom_call.1} parent=27 // pred_check_branch
        %369 = sbr.rel (%p367) target = $region36
      $region35: #{tpu_custom_call.1} parent=27 // pred_region
        %v370 = vld [vmem:[#allocation2] sm:$0xff]
        %v371 = vld [vmem:[#allocation2 + $0x8] sm:$0xff]
        %v372 = vld [vmem:[#allocation2 + $0x10] sm:$0xff]
        %v373 = vld [vmem:[#allocation2 + $0x18] sm:$0xff]
        %v374 = vld [vmem:[#allocation2 + $0x20] sm:$0x7]
        %v375 = vld [vmem:[#allocation2 + $0x28] sm:$0x7]
        %v376 = vadd.f32 %v370, %v371
        %377 = vadd.xlane.f32.xlu0 %v376
        %v378 = vpop.xlane.xlu0 %377
        %v379 = vadd.f32 %v372, %v373
        %380 = vadd.xlane.f32.xlu0 %v379
        %v381 = vpop.xlane.xlu0 %380
        %v382 = vsel %vm258, %v374, 0.0
        %v383 = vsel %vm258, %v375, 0.0
        %v384 = vadd.f32 %v382, %v383
        %385 = vadd.xlane.f32.xlu0 %v384
        %v386 = vpop.xlane.xlu0 %385
        %vm387 = vcmask 7168
        %388 = vst.msk [vmem:[%s204] sm:$0xff] %vm387, %v378
        %389 = vst.msk [vmem:[%s204 + $0x8] sm:$0xff] %vm387, %v381
        %vm390 = vcmask 2048
        %391 = vst.msk [vmem:[%s204 + $0x10] sm:$0x7] %vm390, %v386
        %v392 = vld [vmem:[#allocation3] sm:$0xff]
        %v393 = vld [vmem:[#allocation3 + $0x8] sm:$0xff]
        %v394 = vld [vmem:[#allocation3 + $0x10] sm:$0xff]
        %v395 = vld [vmem:[#allocation3 + $0x18] sm:$0xff]
        %v396 = vld [vmem:[#allocation3 + $0x20] sm:$0x7]
        %v397 = vld [vmem:[#allocation3 + $0x28] sm:$0x7]
        %v398 = vadd.f32 %v392, %v393
        %399 = vadd.xlane.f32.xlu0 %v398
        %v400 = vpop.xlane.xlu0 %399
        %v401 = vadd.f32 %v394, %v395
        %402 = vadd.xlane.f32.xlu0 %v401
        %v403 = vpop.xlane.xlu0 %402
        %v404 = vsel %vm258, %v396, 0.0
        %v405 = vsel %vm258, %v397, 0.0
        %v406 = vadd.f32 %v404, %v405
        %407 = vadd.xlane.f32.xlu0 %v406
        %v408 = vpop.xlane.xlu0 %407
        %vm409 = vcmask 15368
        %410 = vst.msk [vmem:[%s204] sm:$0xff] %vm409, %v400
        %411 = vst.msk [vmem:[%s204 + $0x8] sm:$0xff] %vm409, %v403
        %vm412 = vcmask 10248
        %413 = vst.msk [vmem:[%s204 + $0x10] sm:$0x7] %vm412, %v408
      $region36: #{tpu_custom_call.1} parent=27 // pred_fallthru
        _
      %p414 = scmp.lt.s32.totalorder %s17, 1
      %s415 = scalar_select %p414, %s17, 1
      %s416 = smul.addr %s415, 3
      %s417 = smul.addr %s416, 8
      %s418 = scalar_lea.vmem %s2, %s417
      // Predicated region
      $region37: #{tpu_custom_call.1} parent=27 // pred_check
        %p419 = pneg %p99
      $region38: #{tpu_custom_call.1} parent=27 // pred_check_branch
        %421 = sbr.rel (%p419) target = $region40
      $region39: #{tpu_custom_call.1} parent=27 // pred_region
        _
      $region40: #{tpu_custom_call.1} parent=27 // pred_fallthru
        _
    $region28: #{tpu_custom_call.1} parent=5 // pred_fallthru
      _
    %p422 = scmp.le.s32.totalorder 2, %s8
    // Predicated region
    $region41: #{tpu_custom_call.1} parent=5 // pred_check
      %p423 = pneg %p422
    $region42: #{tpu_custom_call.1} parent=5 // pred_check_branch
      %425 = sbr.rel (%p423) target = $region44
    $region43: #{tpu_custom_call.1} parent=5 // pred_region
      %s426 = ssub.s32 %s8, 2
      // Predicated region
      $region45: #{tpu_custom_call.1} parent=43 // pred_check
        %p427 = pneg %p105
      $region46: #{tpu_custom_call.1} parent=43 // pred_check_branch
        %429 = sbr.rel (%p427) target = $region48
      $region47: #{tpu_custom_call.1} parent=43 // pred_region
        %p430 = scmp.lt.s32.totalorder %s19, 1
        %s431 = scalar_select %p430, %s19, 1
        %s432 = smul.addr %s431, 3
        %s433 = smul.addr %s432, 8
        %s434 = scalar_lea.vmem %s2, %s433
      $region48: #{tpu_custom_call.1} parent=43 // pred_fallthru
        _
    $region44: #{tpu_custom_call.1} parent=5 // pred_fallthru
      _
  $region6: #{tpu_custom_call.1} parent=0 // loop_footer
    %s12 = sadd.s32 1, %s8
  $region7: #{tpu_custom_call.1} parent=0 // loop_footer_branch
    %7 = sbr.rel target = $region3
  $region8: #{tpu_custom_call.1} parent=0 // loop_exit
    _

</llo_original>
